<compile_context>
chip_gen: v6e
topology: v6e:2x2x1
jax: 0.10.0
libtpu: 0.0.40
codegen_flags: <defaults>
</compile_context>

<pallas_src>
import numpy as np
import jax
import jax.numpy as jnp
from jax.experimental import pallas as pl
from jax.experimental.pallas import tpu as pltpu

VMEM_SPEC = pl.BlockSpec(memory_space=pltpu.MemorySpace.VMEM)


# ---------------------- Fused LSTM + folded hetero-GNN kernel ---------------------- #
def make_kernel(S, A, F, H, FH, G, whh_off, b_off):
    """Static shape constants are captured in the closure (tiny, fixed problem)."""

    def kernel(x_ref, lstm_ref, gnn_ref, mix_ref, out_ref):
        # x_ref:    [S*A, F]        time-major, flattened LSTM input
        # lstm_ref: [48, 4H] slab   rows [0:F)=W_ih^T, [whh_off:whh_off+H)=W_hh^T, [b_off]=b_ih+b_hh
        # gnn_ref:  [40, G] slab    rows [0:H)=W_agent, [H:H+FH)=W_hid, [H+FH]=bias_g
        # mix_ref:  [B, A+FH]       cols [0:A)=segment-mean matrix M, [A:A+FH)=hideout_obs
        B = mix_ref.shape[0]

        wih = lstm_ref[0:F, :]                          # [F, 4H]
        whh = lstm_ref[whh_off:whh_off + H, :]          # [H, 4H]  (sublane-aligned slice)
        bias = lstm_ref[b_off:b_off + 1, :]             # [1, 4H]

        # One batched input projection for all timesteps (off the serial critical path).
        gx_all = (jnp.dot(x_ref[...], wih, preferred_element_type=jnp.float32)
                  + jnp.broadcast_to(bias, (S * A, 4 * H)))           # [S*A, 4H]

        # Recurrence with register-carried h / c; statically unrolled (S small & static).
        h = jnp.zeros((A, H), jnp.float32)
        c = jnp.zeros((A, H), jnp.float32)
        for t in range(S):
            gates = (gx_all[t * A:(t + 1) * A, :]                      # sublane-aligned slice
                     + jnp.dot(h, whh, preferred_element_type=jnp.float32))   # [A, 4H]
            sig = jax.nn.sigmoid(gates)                 # ONE EUP op covers i, f, o lanes
            i_g = sig[:, 0:H]
            f_g = sig[:, H:2 * H]
            o_g = sig[:, 3 * H:4 * H]
            g_g = jnp.tanh(gates[:, 2 * H:3 * H])
            c = f_g * c + i_g * g_g
            h = o_g * jnp.tanh(c)

        # ---- folded hetero-GNN epilogue ----
        w_agent = gnn_ref[0:H, :]                       # [H, G]
        w_hid = gnn_ref[H:H + FH, :]                    # [FH, G]
        bias_g = gnn_ref[H + FH:H + FH + 1, :]          # [1, G]
        m_mat = mix_ref[:, 0:A]                         # [B, A]
        hide = mix_ref[:, A:A + FH]                     # [B, FH]

        mean_hn = jnp.dot(m_mat, h, preferred_element_type=jnp.float32)        # [B, H]
        ss2 = (jnp.dot(mean_hn, w_agent, preferred_element_type=jnp.float32)
               + jnp.dot(hide, w_hid, preferred_element_type=jnp.float32)
               + jnp.broadcast_to(bias_g, (B, G)))
        out_ref[...] = jnp.tanh(ss2)                                            # [B, G]

    return kernel


def run_fused(x_flat, lstm_slab, gnn_slab, mix_slab, *, S, A, F, H, FH, G, whh_off, b_off):
    B = mix_slab.shape[0]
    kernel = make_kernel(S, A, F, H, FH, G, whh_off, b_off)
    args = tuple(jnp.asarray(a, jnp.float32) for a in (x_flat, lstm_slab, gnn_slab, mix_slab))
    return pl.pallas_call(
        kernel,
        out_shape=jax.ShapeDtypeStruct((B, G), jnp.float32),
        in_specs=[VMEM_SPEC] * len(args),
        out_specs=VMEM_SPEC,
    )(*args)


# -------------------------------- Driver ------------------------------------ #
def main():
    # Small shapes consistent with the module's forward.
    B, S, MAX_A, F = 2, 8, 5, 4          # batch, seq_len, max agents, input_dim
    H, G = 32, 16                        # hidden_dim, gnn_hidden
    FH, FT = 2, 1                        # hideout / timestep feature dims
    num_agents = [3, 5]

    key = jax.random.PRNGKey(0)
    ks = jax.random.split(key, 24)
    u = lambda k, shape, s=0.2: jax.random.uniform(k, shape, jnp.float32, -s, s)

    # Inputs.
    agent_obs = u(ks[0], (B, S, MAX_A, F), 1.0)
    hideout_obs = u(ks[1], (B, FH), 1.0)
    timestep_obs = u(ks[2], (B, FT), 1.0)

    # LSTM parameters (PyTorch nn.LSTM layout, gate order i,f,g,o).
    w_ih = u(ks[3], (4 * H, F))
    w_hh = u(ks[4], (4 * H, H))
    b_ih = u(ks[5], (4 * H,))
    b_hh = u(ks[6], (4 * H,))

    # conv1 SAGEConv params that influence the output.
    W1_aa = u(ks[7], (H, H));   b1_aa = u(ks[8], (H,))     # (agent, to, agent_summ) lin_l
    W1_hh = u(ks[9], (H, FH));  b1_hh = u(ks[10], (H,))    # (hideout, to, hideout_summ) lin_l
    b1_hs = u(ks[11], (H,))                                # (hideout_summ, to, state_summ) bias
    b1_as = u(ks[12], (H,))                                # (agent_summ, to, state_summ) bias
    b1_rev_ss_hs = u(ks[13], (H,))                         # (state_summ, rev_to, hideout_summ) bias
    b1_rev_ss_as = u(ks[14], (H,))                         # (state_summ, rev_to, agent_summ) bias

    # conv2 SAGEConv params for the two edge types feeding state_summ.
    W2_hs_l = u(ks[15], (G, H)); W2_hs_r = u(ks[16], (G, H)); b2_hs = u(ks[17], (G,))
    W2_as_l = u(ks[18], (G, H)); W2_as_r = u(ks[19], (G, H)); b2_as = u(ks[20], (G,))

    # ---- glue: build time-major LSTM input and segment-mean matrix ----
    lstm_input = jnp.concatenate(
        [agent_obs[b, :, :num_agents[b], :] for b in range(B)], axis=1)  # [S, A_total, F]
    A = lstm_input.shape[1]
    x_flat = np.asarray(lstm_input).reshape(S * A, F)                    # layout only, no math

    M_np = np.zeros((B, A), np.float32)
    off = 0
    for b, n in enumerate(num_agents):
        M_np[b, off:off + n] = 1.0 / n
        off += n

    # ---- parameter folding / packing (pure parameter setup, no data math) ----
    # LSTM slab [48, 4H]: W_ih^T rows 0..F-1, W_hh^T at a sublane-aligned offset, bias row last.
    whh_off = ((F + 7) // 8) * 8
    b_off = whh_off + H
    lstm_rows = ((b_off + 1 + 7) // 8) * 8
    lstm_slab = np.zeros((lstm_rows, 4 * H), np.float32)
    lstm_slab[0:F] = np.asarray(w_ih).T
    lstm_slab[whh_off:whh_off + H] = np.asarray(w_hh).T
    lstm_slab[b_off] = np.asarray(b_ih + b_hh)

    # Folded GNN slab [40, G].
    W_agent = np.asarray(W1_aa).T @ np.asarray(W2_as_l).T                # [H, G]
    W_hid = np.asarray(W1_hh).T @ np.asarray(W2_hs_l).T                  # [FH, G]
    bias_g = (np.asarray(b1_aa + b1_rev_ss_as) @ np.asarray(W2_as_l).T
              + np.asarray(b1_hh + b1_rev_ss_hs) @ np.asarray(W2_hs_l).T
              + np.asarray(b1_hs + b1_as) @ np.asarray(W2_hs_r + W2_as_r).T
              + np.asarray(b2_hs + b2_as))                               # [G]
    gnn_rows = ((H + FH + 1 + 7) // 8) * 8
    gnn_slab = np.zeros((gnn_rows, G), np.float32)
    gnn_slab[0:H] = W_agent
    gnn_slab[H:H + FH] = W_hid
    gnn_slab[H + FH] = bias_g

    # Per-batch data slab: segment-mean matrix | hideout features.
    mix_slab = np.concatenate([M_np, np.asarray(hideout_obs)], axis=-1)  # [B, A+FH]

    # ---- single fused kernel: LSTM recurrence + folded hetero-GNN ----
    res = run_fused(x_flat, lstm_slab, gnn_slab, mix_slab,
                    S=S, A=A, F=F, H=H, FH=FH, G=G, whh_off=whh_off, b_off=b_off)  # [B, G]
    # Tiny output assembly left to XLA (review: cheaper than in-kernel placement matmuls).
    out = jnp.concatenate([res, hideout_obs, timestep_obs], axis=-1)
    out = jax.block_until_ready(out)                                     # [B, G+FH+FT]

    # ---- pure-JAX reference for sanity check ----
    def reference():
        h = jnp.zeros((A, H), jnp.float32)
        c = jnp.zeros((A, H), jnp.float32)
        for t in range(S):
            gates = lstm_input[t] @ w_ih.T + h @ w_hh.T + b_ih + b_hh
            i = jax.nn.sigmoid(gates[:, :H]); f = jax.nn.sigmoid(gates[:, H:2 * H])
            g = jnp.tanh(gates[:, 2 * H:3 * H]); o = jax.nn.sigmoid(gates[:, 3 * H:])
            c = f * c + i * g
            h = o * jnp.tanh(c)
        mean_hn = jnp.asarray(M_np) @ h
        agent_summ1 = mean_hn @ W1_aa.T + b1_aa + b1_rev_ss_as
        hideout_summ1 = hideout_obs @ W1_hh.T + b1_hh + b1_rev_ss_hs
        ss1 = jnp.broadcast_to(b1_hs + b1_as, (B, H))
        ss2 = (hideout_summ1 @ W2_hs_l.T + ss1 @ W2_hs_r.T + b2_hs
               + agent_summ1 @ W2_as_l.T + ss1 @ W2_as_r.T + b2_as)
        return jnp.concatenate([jnp.tanh(ss2), hideout_obs, timestep_obs], axis=-1)

    ref_out = jax.block_until_ready(reference())
    np.testing.assert_allclose(np.asarray(out), np.asarray(ref_out), rtol=2e-3, atol=2e-3)

    print("KERNEL_OK")


if __name__ == "__main__":
    main()
</pallas_src>

<mosaic_0001>
module attributes {stable_mosaic.version = 11 : i64} {
  func.func @kernel(%arg0: memref<64x4xf32, #tpu.memory_space<vmem>>, %arg1: memref<48x128xf32, #tpu.memory_space<vmem>>, %arg2: memref<40x16xf32, #tpu.memory_space<vmem>>, %arg3: memref<2x10xf32, #tpu.memory_space<vmem>>, %arg4: memref<2x16xf32, #tpu.memory_space<vmem>>) attributes {dimension_semantics = [], scalar_prefetch = 0 : i64, scratch_operands = 0 : i64, tpu.core_type = #tpu.core_type<tc>} {
    %c0 = arith.constant 0 : index
    %c0_0 = arith.constant 0 : index
    %0 = vector.load %arg1[%c0, %c0_0] : memref<48x128xf32, #tpu.memory_space<vmem>>, vector<4x128xf32>
    %c8 = arith.constant 8 : index
    %c0_1 = arith.constant 0 : index
    %1 = vector.load %arg1[%c8, %c0_1] : memref<48x128xf32, #tpu.memory_space<vmem>>, vector<32x128xf32>
    %c40 = arith.constant 40 : index
    %c0_2 = arith.constant 0 : index
    %2 = vector.load %arg1[%c40, %c0_2] : memref<48x128xf32, #tpu.memory_space<vmem>>, vector<1x128xf32>
    %c0_3 = arith.constant 0 : index
    %c0_4 = arith.constant 0 : index
    %3 = vector.load %arg0[%c0_3, %c0_4] : memref<64x4xf32, #tpu.memory_space<vmem>>, vector<64x4xf32>
    %cst = arith.constant dense<0.000000e+00> : vector<64x128xf32>
    %4 = tpu.matmul %3, %0, %cst {dimension_numbers = #tpu.dot_dimension_numbers<[1], [0], [0], [1], [0, 0, 1, 1], [], []>} : vector<64x4xf32>, vector<4x128xf32>, vector<64x128xf32> -> vector<64x128xf32>
    %5 = vector.shape_cast %2 : vector<1x128xf32> to vector<1x128xf32>
    %6 = vector.broadcast %5 : vector<1x128xf32> to vector<64x128xf32>
    %7 = arith.addf %4, %6 : vector<64x128xf32>
    %cst_5 = arith.constant 0.000000e+00 : f32
    %8 = vector.broadcast %cst_5 : f32 to vector<8x32xf32>
    %cst_6 = arith.constant 0.000000e+00 : f32
    %9 = vector.broadcast %cst_6 : f32 to vector<8x32xf32>
    %10 = vector.extract_strided_slice %7 {offsets = [0, 0], sizes = [8, 128], strides = [1, 1]} : vector<64x128xf32> to vector<8x128xf32>
    %cst_7 = arith.constant dense<0.000000e+00> : vector<8x128xf32>
    %11 = tpu.matmul %8, %1, %cst_7 {dimension_numbers = #tpu.dot_dimension_numbers<[1], [0], [0], [1], [0, 0, 1, 1], [], []>} : vector<8x32xf32>, vector<32x128xf32>, vector<8x128xf32> -> vector<8x128xf32>
    %12 = arith.addf %10, %11 : vector<8x128xf32>
    %13 = arith.negf %12 : vector<8x128xf32>
    %14 = math.exp %13 : vector<8x128xf32>
    %cst_8 = arith.constant 1.000000e+00 : f32
    %15 = vector.broadcast %cst_8 : f32 to vector<8x128xf32>
    %16 = arith.addf %15, %14 : vector<8x128xf32>
    %17 = arith.divf %15, %16 : vector<8x128xf32>
    %18 = vector.extract_strided_slice %17 {offsets = [0, 0], sizes = [8, 32], strides = [1, 1]} : vector<8x128xf32> to vector<8x32xf32>
    %19 = vector.extract_strided_slice %17 {offsets = [0, 32], sizes = [8, 32], strides = [1, 1]} : vector<8x128xf32> to vector<8x32xf32>
    %20 = vector.extract_strided_slice %17 {offsets = [0, 96], sizes = [8, 32], strides = [1, 1]} : vector<8x128xf32> to vector<8x32xf32>
    %21 = vector.extract_strided_slice %12 {offsets = [0, 64], sizes = [8, 32], strides = [1, 1]} : vector<8x128xf32> to vector<8x32xf32>
    %22 = math.tanh %21 : vector<8x32xf32>
    %23 = arith.mulf %19, %9 : vector<8x32xf32>
    %24 = arith.mulf %18, %22 : vector<8x32xf32>
    %25 = arith.addf %23, %24 : vector<8x32xf32>
    %26 = math.tanh %25 : vector<8x32xf32>
    %27 = arith.mulf %20, %26 : vector<8x32xf32>
    %28 = vector.extract_strided_slice %7 {offsets = [8, 0], sizes = [8, 128], strides = [1, 1]} : vector<64x128xf32> to vector<8x128xf32>
    %cst_9 = arith.constant dense<0.000000e+00> : vector<8x128xf32>
    %29 = tpu.matmul %27, %1, %cst_9 {dimension_numbers = #tpu.dot_dimension_numbers<[1], [0], [0], [1], [0, 0, 1, 1], [], []>} : vector<8x32xf32>, vector<32x128xf32>, vector<8x128xf32> -> vector<8x128xf32>
    %30 = arith.addf %28, %29 : vector<8x128xf32>
    %31 = arith.negf %30 : vector<8x128xf32>
    %32 = math.exp %31 : vector<8x128xf32>
    %cst_10 = arith.constant 1.000000e+00 : f32
    %33 = vector.broadcast %cst_10 : f32 to vector<8x128xf32>
    %34 = arith.addf %33, %32 : vector<8x128xf32>
    %35 = arith.divf %33, %34 : vector<8x128xf32>
    %36 = vector.extract_strided_slice %35 {offsets = [0, 0], sizes = [8, 32], strides = [1, 1]} : vector<8x128xf32> to vector<8x32xf32>
    %37 = vector.extract_strided_slice %35 {offsets = [0, 32], sizes = [8, 32], strides = [1, 1]} : vector<8x128xf32> to vector<8x32xf32>
    %38 = vector.extract_strided_slice %35 {offsets = [0, 96], sizes = [8, 32], strides = [1, 1]} : vector<8x128xf32> to vector<8x32xf32>
    %39 = vector.extract_strided_slice %30 {offsets = [0, 64], sizes = [8, 32], strides = [1, 1]} : vector<8x128xf32> to vector<8x32xf32>
    %40 = math.tanh %39 : vector<8x32xf32>
    %41 = arith.mulf %37, %25 : vector<8x32xf32>
    %42 = arith.mulf %36, %40 : vector<8x32xf32>
    %43 = arith.addf %41, %42 : vector<8x32xf32>
    %44 = math.tanh %43 : vector<8x32xf32>
    %45 = arith.mulf %38, %44 : vector<8x32xf32>
    %46 = vector.extract_strided_slice %7 {offsets = [16, 0], sizes = [8, 128], strides = [1, 1]} : vector<64x128xf32> to vector<8x128xf32>
    %cst_11 = arith.constant dense<0.000000e+00> : vector<8x128xf32>
    %47 = tpu.matmul %45, %1, %cst_11 {dimension_numbers = #tpu.dot_dimension_numbers<[1], [0], [0], [1], [0, 0, 1, 1], [], []>} : vector<8x32xf32>, vector<32x128xf32>, vector<8x128xf32> -> vector<8x128xf32>
    %48 = arith.addf %46, %47 : vector<8x128xf32>
    %49 = arith.negf %48 : vector<8x128xf32>
    %50 = math.exp %49 : vector<8x128xf32>
    %cst_12 = arith.constant 1.000000e+00 : f32
    %51 = vector.broadcast %cst_12 : f32 to vector<8x128xf32>
    %52 = arith.addf %51, %50 : vector<8x128xf32>
    %53 = arith.divf %51, %52 : vector<8x128xf32>
    %54 = vector.extract_strided_slice %53 {offsets = [0, 0], sizes = [8, 32], strides = [1, 1]} : vector<8x128xf32> to vector<8x32xf32>
    %55 = vector.extract_strided_slice %53 {offsets = [0, 32], sizes = [8, 32], strides = [1, 1]} : vector<8x128xf32> to vector<8x32xf32>
    %56 = vector.extract_strided_slice %53 {offsets = [0, 96], sizes = [8, 32], strides = [1, 1]} : vector<8x128xf32> to vector<8x32xf32>
    %57 = vector.extract_strided_slice %48 {offsets = [0, 64], sizes = [8, 32], strides = [1, 1]} : vector<8x128xf32> to vector<8x32xf32>
    %58 = math.tanh %57 : vector<8x32xf32>
    %59 = arith.mulf %55, %43 : vector<8x32xf32>
    %60 = arith.mulf %54, %58 : vector<8x32xf32>
    %61 = arith.addf %59, %60 : vector<8x32xf32>
    %62 = math.tanh %61 : vector<8x32xf32>
    %63 = arith.mulf %56, %62 : vector<8x32xf32>
    %64 = vector.extract_strided_slice %7 {offsets = [24, 0], sizes = [8, 128], strides = [1, 1]} : vector<64x128xf32> to vector<8x128xf32>
    %cst_13 = arith.constant dense<0.000000e+00> : vector<8x128xf32>
    %65 = tpu.matmul %63, %1, %cst_13 {dimension_numbers = #tpu.dot_dimension_numbers<[1], [0], [0], [1], [0, 0, 1, 1], [], []>} : vector<8x32xf32>, vector<32x128xf32>, vector<8x128xf32> -> vector<8x128xf32>
    %66 = arith.addf %64, %65 : vector<8x128xf32>
    %67 = arith.negf %66 : vector<8x128xf32>
    %68 = math.exp %67 : vector<8x128xf32>
    %cst_14 = arith.constant 1.000000e+00 : f32
    %69 = vector.broadcast %cst_14 : f32 to vector<8x128xf32>
    %70 = arith.addf %69, %68 : vector<8x128xf32>
    %71 = arith.divf %69, %70 : vector<8x128xf32>
    %72 = vector.extract_strided_slice %71 {offsets = [0, 0], sizes = [8, 32], strides = [1, 1]} : vector<8x128xf32> to vector<8x32xf32>
    %73 = vector.extract_strided_slice %71 {offsets = [0, 32], sizes = [8, 32], strides = [1, 1]} : vector<8x128xf32> to vector<8x32xf32>
    %74 = vector.extract_strided_slice %71 {offsets = [0, 96], sizes = [8, 32], strides = [1, 1]} : vector<8x128xf32> to vector<8x32xf32>
    %75 = vector.extract_strided_slice %66 {offsets = [0, 64], sizes = [8, 32], strides = [1, 1]} : vector<8x128xf32> to vector<8x32xf32>
    %76 = math.tanh %75 : vector<8x32xf32>
    %77 = arith.mulf %73, %61 : vector<8x32xf32>
    %78 = arith.mulf %72, %76 : vector<8x32xf32>
    %79 = arith.addf %77, %78 : vector<8x32xf32>
    %80 = math.tanh %79 : vector<8x32xf32>
    %81 = arith.mulf %74, %80 : vector<8x32xf32>
    %82 = vector.extract_strided_slice %7 {offsets = [32, 0], sizes = [8, 128], strides = [1, 1]} : vector<64x128xf32> to vector<8x128xf32>
    %cst_15 = arith.constant dense<0.000000e+00> : vector<8x128xf32>
    %83 = tpu.matmul %81, %1, %cst_15 {dimension_numbers = #tpu.dot_dimension_numbers<[1], [0], [0], [1], [0, 0, 1, 1], [], []>} : vector<8x32xf32>, vector<32x128xf32>, vector<8x128xf32> -> vector<8x128xf32>
    %84 = arith.addf %82, %83 : vector<8x128xf32>
    %85 = arith.negf %84 : vector<8x128xf32>
    %86 = math.exp %85 : vector<8x128xf32>
    %cst_16 = arith.constant 1.000000e+00 : f32
    %87 = vector.broadcast %cst_16 : f32 to vector<8x128xf32>
    %88 = arith.addf %87, %86 : vector<8x128xf32>
    %89 = arith.divf %87, %88 : vector<8x128xf32>
    %90 = vector.extract_strided_slice %89 {offsets = [0, 0], sizes = [8, 32], strides = [1, 1]} : vector<8x128xf32> to vector<8x32xf32>
    %91 = vector.extract_strided_slice %89 {offsets = [0, 32], sizes = [8, 32], strides = [1, 1]} : vector<8x128xf32> to vector<8x32xf32>
    %92 = vector.extract_strided_slice %89 {offsets = [0, 96], sizes = [8, 32], strides = [1, 1]} : vector<8x128xf32> to vector<8x32xf32>
    %93 = vector.extract_strided_slice %84 {offsets = [0, 64], sizes = [8, 32], strides = [1, 1]} : vector<8x128xf32> to vector<8x32xf32>
    %94 = math.tanh %93 : vector<8x32xf32>
    %95 = arith.mulf %91, %79 : vector<8x32xf32>
    %96 = arith.mulf %90, %94 : vector<8x32xf32>
    %97 = arith.addf %95, %96 : vector<8x32xf32>
    %98 = math.tanh %97 : vector<8x32xf32>
    %99 = arith.mulf %92, %98 : vector<8x32xf32>
    %100 = vector.extract_strided_slice %7 {offsets = [40, 0], sizes = [8, 128], strides = [1, 1]} : vector<64x128xf32> to vector<8x128xf32>
    %cst_17 = arith.constant dense<0.000000e+00> : vector<8x128xf32>
    %101 = tpu.matmul %99, %1, %cst_17 {dimension_numbers = #tpu.dot_dimension_numbers<[1], [0], [0], [1], [0, 0, 1, 1], [], []>} : vector<8x32xf32>, vector<32x128xf32>, vector<8x128xf32> -> vector<8x128xf32>
    %102 = arith.addf %100, %101 : vector<8x128xf32>
    %103 = arith.negf %102 : vector<8x128xf32>
    %104 = math.exp %103 : vector<8x128xf32>
    %cst_18 = arith.constant 1.000000e+00 : f32
    %105 = vector.broadcast %cst_18 : f32 to vector<8x128xf32>
    %106 = arith.addf %105, %104 : vector<8x128xf32>
    %107 = arith.divf %105, %106 : vector<8x128xf32>
    %108 = vector.extract_strided_slice %107 {offsets = [0, 0], sizes = [8, 32], strides = [1, 1]} : vector<8x128xf32> to vector<8x32xf32>
    %109 = vector.extract_strided_slice %107 {offsets = [0, 32], sizes = [8, 32], strides = [1, 1]} : vector<8x128xf32> to vector<8x32xf32>
    %110 = vector.extract_strided_slice %107 {offsets = [0, 96], sizes = [8, 32], strides = [1, 1]} : vector<8x128xf32> to vector<8x32xf32>
    %111 = vector.extract_strided_slice %102 {offsets = [0, 64], sizes = [8, 32], strides = [1, 1]} : vector<8x128xf32> to vector<8x32xf32>
    %112 = math.tanh %111 : vector<8x32xf32>
    %113 = arith.mulf %109, %97 : vector<8x32xf32>
    %114 = arith.mulf %108, %112 : vector<8x32xf32>
    %115 = arith.addf %113, %114 : vector<8x32xf32>
    %116 = math.tanh %115 : vector<8x32xf32>
    %117 = arith.mulf %110, %116 : vector<8x32xf32>
    %118 = vector.extract_strided_slice %7 {offsets = [48, 0], sizes = [8, 128], strides = [1, 1]} : vector<64x128xf32> to vector<8x128xf32>
    %cst_19 = arith.constant dense<0.000000e+00> : vector<8x128xf32>
    %119 = tpu.matmul %117, %1, %cst_19 {dimension_numbers = #tpu.dot_dimension_numbers<[1], [0], [0], [1], [0, 0, 1, 1], [], []>} : vector<8x32xf32>, vector<32x128xf32>, vector<8x128xf32> -> vector<8x128xf32>
    %120 = arith.addf %118, %119 : vector<8x128xf32>
    %121 = arith.negf %120 : vector<8x128xf32>
    %122 = math.exp %121 : vector<8x128xf32>
    %cst_20 = arith.constant 1.000000e+00 : f32
    %123 = vector.broadcast %cst_20 : f32 to vector<8x128xf32>
    %124 = arith.addf %123, %122 : vector<8x128xf32>
    %125 = arith.divf %123, %124 : vector<8x128xf32>
    %126 = vector.extract_strided_slice %125 {offsets = [0, 0], sizes = [8, 32], strides = [1, 1]} : vector<8x128xf32> to vector<8x32xf32>
    %127 = vector.extract_strided_slice %125 {offsets = [0, 32], sizes = [8, 32], strides = [1, 1]} : vector<8x128xf32> to vector<8x32xf32>
    %128 = vector.extract_strided_slice %125 {offsets = [0, 96], sizes = [8, 32], strides = [1, 1]} : vector<8x128xf32> to vector<8x32xf32>
    %129 = vector.extract_strided_slice %120 {offsets = [0, 64], sizes = [8, 32], strides = [1, 1]} : vector<8x128xf32> to vector<8x32xf32>
    %130 = math.tanh %129 : vector<8x32xf32>
    %131 = arith.mulf %127, %115 : vector<8x32xf32>
    %132 = arith.mulf %126, %130 : vector<8x32xf32>
    %133 = arith.addf %131, %132 : vector<8x32xf32>
    %134 = math.tanh %133 : vector<8x32xf32>
    %135 = arith.mulf %128, %134 : vector<8x32xf32>
    %136 = vector.extract_strided_slice %7 {offsets = [56, 0], sizes = [8, 128], strides = [1, 1]} : vector<64x128xf32> to vector<8x128xf32>
    %cst_21 = arith.constant dense<0.000000e+00> : vector<8x128xf32>
    %137 = tpu.matmul %135, %1, %cst_21 {dimension_numbers = #tpu.dot_dimension_numbers<[1], [0], [0], [1], [0, 0, 1, 1], [], []>} : vector<8x32xf32>, vector<32x128xf32>, vector<8x128xf32> -> vector<8x128xf32>
    %138 = arith.addf %136, %137 : vector<8x128xf32>
    %139 = arith.negf %138 : vector<8x128xf32>
    %140 = math.exp %139 : vector<8x128xf32>
    %cst_22 = arith.constant 1.000000e+00 : f32
    %141 = vector.broadcast %cst_22 : f32 to vector<8x128xf32>
    %142 = arith.addf %141, %140 : vector<8x128xf32>
    %143 = arith.divf %141, %142 : vector<8x128xf32>
    %144 = vector.extract_strided_slice %143 {offsets = [0, 0], sizes = [8, 32], strides = [1, 1]} : vector<8x128xf32> to vector<8x32xf32>
    %145 = vector.extract_strided_slice %143 {offsets = [0, 32], sizes = [8, 32], strides = [1, 1]} : vector<8x128xf32> to vector<8x32xf32>
    %146 = vector.extract_strided_slice %143 {offsets = [0, 96], sizes = [8, 32], strides = [1, 1]} : vector<8x128xf32> to vector<8x32xf32>
    %147 = vector.extract_strided_slice %138 {offsets = [0, 64], sizes = [8, 32], strides = [1, 1]} : vector<8x128xf32> to vector<8x32xf32>
    %148 = math.tanh %147 : vector<8x32xf32>
    %149 = arith.mulf %145, %133 : vector<8x32xf32>
    %150 = arith.mulf %144, %148 : vector<8x32xf32>
    %151 = arith.addf %149, %150 : vector<8x32xf32>
    %152 = math.tanh %151 : vector<8x32xf32>
    %153 = arith.mulf %146, %152 : vector<8x32xf32>
    %c0_23 = arith.constant 0 : index
    %c0_24 = arith.constant 0 : index
    %154 = vector.load %arg2[%c0_23, %c0_24] : memref<40x16xf32, #tpu.memory_space<vmem>>, vector<32x16xf32>
    %c32 = arith.constant 32 : index
    %c0_25 = arith.constant 0 : index
    %155 = vector.load %arg2[%c32, %c0_25] : memref<40x16xf32, #tpu.memory_space<vmem>>, vector<2x16xf32>
    %c34 = arith.constant 34 : index
    %c0_26 = arith.constant 0 : index
    %156 = vector.load %arg2[%c34, %c0_26] : memref<40x16xf32, #tpu.memory_space<vmem>>, vector<1x16xf32>
    %c0_27 = arith.constant 0 : index
    %c0_28 = arith.constant 0 : index
    %157 = vector.load %arg3[%c0_27, %c0_28] : memref<2x10xf32, #tpu.memory_space<vmem>>, vector<2x8xf32>
    %c0_29 = arith.constant 0 : index
    %c8_30 = arith.constant 8 : index
    %158 = vector.load %arg3[%c0_29, %c8_30] : memref<2x10xf32, #tpu.memory_space<vmem>>, vector<2x2xf32>
    %cst_31 = arith.constant dense<0.000000e+00> : vector<2x32xf32>
    %159 = tpu.matmul %157, %153, %cst_31 {dimension_numbers = #tpu.dot_dimension_numbers<[1], [0], [0], [1], [0, 0, 1, 1], [], []>} : vector<2x8xf32>, vector<8x32xf32>, vector<2x32xf32> -> vector<2x32xf32>
    %cst_32 = arith.constant dense<0.000000e+00> : vector<2x16xf32>
    %160 = tpu.matmul %159, %154, %cst_32 {dimension_numbers = #tpu.dot_dimension_numbers<[1], [0], [0], [1], [0, 0, 1, 1], [], []>} : vector<2x32xf32>, vector<32x16xf32>, vector<2x16xf32> -> vector<2x16xf32>
    %cst_33 = arith.constant dense<0.000000e+00> : vector<2x16xf32>
    %161 = tpu.matmul %158, %155, %cst_33 {dimension_numbers = #tpu.dot_dimension_numbers<[1], [0], [0], [1], [0, 0, 1, 1], [], []>} : vector<2x2xf32>, vector<2x16xf32>, vector<2x16xf32> -> vector<2x16xf32>
    %162 = arith.addf %160, %161 : vector<2x16xf32>
    %163 = vector.shape_cast %156 : vector<1x16xf32> to vector<1x16xf32>
    %164 = vector.broadcast %163 : vector<1x16xf32> to vector<2x16xf32>
    %165 = arith.addf %162, %164 : vector<2x16xf32>
    %166 = math.tanh %165 : vector<2x16xf32>
    %c0_34 = arith.constant 0 : index
    %c0_35 = arith.constant 0 : index
    %167 = vector.load %arg4[%c0_34, %c0_35] : memref<2x16xf32, #tpu.memory_space<vmem>>, vector<2x16xf32>
    tpu.vector_store %arg4[%c0_34, %c0_35], %166 {strides = array<i32>} : memref<2x16xf32, #tpu.memory_space<vmem>>, vector<2x16xf32>,
    return
  }
}

</mosaic_0001>

<llo_original>
// kernel: tpu_custom_call.1
$region0: #{tpu_custom_call.1}
  #allocation0 [shape = 'u32[]', space=smem, size = 0x4, offset = 0x4, fixed_abs, tag = 'smem constant byte address 0x4 - core index']
  #allocation1 [shape = 'u32[144,128]{1,0:T(1,128)}', space=vmem, size = 0x12000, scoped, tag = 'internal scratch']
  %s0 = inlined_call_operand.vmem [shape: f32[64,4], index: 0, kind: input, shape index: {}]
  %s1 = inlined_call_operand.vmem [shape: f32[48,128], index: 1, kind: input, shape index: {}]
  %s2 = inlined_call_operand.vmem [shape: f32[40,16], index: 2, kind: input, shape index: {}]
  %s3 = inlined_call_operand.vmem [shape: f32[2,10], index: 3, kind: input, shape index: {}]
  %s4 = inlined_call_operand.hbm [shape: f32[2,16], index: 4, kind: output, shape index: {}]
  %s5 = sld [smem:[#allocation0]]
  $region26: #{tpu_custom_call.1} parent=0
    _
  %s7 = ssub.s32 1, %s5
  %s8 = scalar_select 0, %s7, %s5
  $region1: #{tpu_custom_call.1} parent=0
    #allocation2 [shape = 'u8[1024]{0}', space=vmem, size = 0x400, scoped, tag = 'output window, operand 0, single buffered']
    #allocation3 [shape = 's32[1]{0}', space=sflag, size = 0x4, scoped, tag = 'scoped memory for tpu_custom_call.1']
    %9 = vsyncpa [#allocation3], 0
    // Predicated region
    $region2: #{tpu_custom_call.1} parent=1 // pred_check
      _
    $region3: #{tpu_custom_call.1} parent=1 // pred_check_branch
      %11 = sbr.rel (0) target = $region5
    $region4: #{tpu_custom_call.1} parent=1 // pred_region
      _
    $region5: #{tpu_custom_call.1} parent=1 // pred_fallthru
      _
    // Predicated region
    $region6: #{tpu_custom_call.1} parent=1 // pred_check
      _
    $region7: #{tpu_custom_call.1} parent=1 // pred_check_branch
      %13 = sbr.rel (0) target = $region9
    $region8: #{tpu_custom_call.1} parent=1 // pred_region
      _
    $region9: #{tpu_custom_call.1} parent=1 // pred_fallthru
      _
    // Predicated region
    $region10: #{tpu_custom_call.1} parent=1 // pred_check
      _
    $region11: #{tpu_custom_call.1} parent=1 // pred_check_branch
      %15 = sbr.rel (0) target = $region13
    $region12: #{tpu_custom_call.1} parent=1 // pred_region
      _
    $region13: #{tpu_custom_call.1} parent=1 // pred_fallthru
      _
    // Predicated region
    $region14: #{tpu_custom_call.1} parent=1 // pred_check
      _
    $region15: #{tpu_custom_call.1} parent=1 // pred_check_branch
      %17 = sbr.rel (0) target = $region17
    $region16: #{tpu_custom_call.1} parent=1 // pred_region
      _
    $region17: #{tpu_custom_call.1} parent=1 // pred_fallthru
      _
    %v18 = vld [vmem:[%s1] sm:$0xf]
    %v19 = vld [vmem:[%s1 + $0x8] sm:$0xff]
    %v20 = vld [vmem:[%s1 + $0x10] sm:$0xff]
    %v21 = vld [vmem:[%s1 + $0x18] sm:$0xff]
    %v22 = vld [vmem:[%s1 + $0x20] sm:$0xff]
    %v23 = vld [vmem:[%s1 + $0x28] sm:$0x1]
    %v24 = vld [vmem:[%s0] sm:$0xff]
    %v25 = vld [vmem:[%s0 + $0x8] sm:$0xff]
    %v26 = vld [vmem:[%s0 + $0x10] sm:$0xff]
    %v27 = vld [vmem:[%s0 + $0x18] sm:$0xff]
    %v28 = vld [vmem:[%s0 + $0x20] sm:$0xff]
    %v29 = vld [vmem:[%s0 + $0x28] sm:$0xff]
    %v30 = vld [vmem:[%s0 + $0x30] sm:$0xff]
    %v31 = vld [vmem:[%s0 + $0x38] sm:$0xff]
    %v32 = vlaneseq
    %v33 = vshrl.u32 %v32, 7
    %v34 = vsub.s32 0, %v33
    %v35 = vrot.slane %v23, %v34
    %vm36 = vcmask 31744
    %v38 = vsel %vm36, %v24, 0
    %v41 = vsel %vm36, %v25, 0
    %v44 = vsel %vm36, %v26, 0
    %v47 = vsel %vm36, %v27, 0
    %v50 = vsel %vm36, %v28, 0
    %v53 = vsel %vm36, %v29, 0
    %v56 = vsel %vm36, %v30, 0
    %v59 = vsel %vm36, %v31, 0
    %vm61 = vcmask 1043456
    %v63 = vsel %vm61, %v18, 0
    %65 = vmatprep.subr.mxu0 0.0
    %66 = vmatpush1.msra.mxu0 0.0
    %67 = vmatprep.subr.mxu0 0.0
    %68 = vmatpush1.msra.mxu0 0.0
    %69 = vmatprep.subr.mxu0 0.0
    %70 = vmatpush1.msra.mxu0 0.0
    %71 = vmatprep.subr.mxu0 0.0
    %72 = vmatpush1.msra.mxu0 0.0
    %73 = vmatprep.subr.mxu0 0.0
    %74 = vmatpush1.msra.mxu0 0.0
    %75 = vmatprep.subr.mxu0 0.0
    %76 = vmatpush1.msra.mxu0 0.0
    %77 = vmatprep.subr.mxu0 0.0
    %78 = vmatpush1.msra.mxu0 0.0
    %79 = vmatprep.subr.mxu0 0.0
    %80 = vmatpush1.msra.mxu0 0.0
    %81 = vmatprep.subr.mxu0 0.0
    %82 = vmatpush1.msra.mxu0 0.0
    %83 = vmatprep.subr.mxu0 0.0
    %84 = vmatpush1.msra.mxu0 0.0
    %85 = vmatprep.subr.mxu0 0.0
    %86 = vmatpush1.msra.mxu0 0.0
    %87 = vmatprep.subr.mxu0 0.0
    %88 = vmatpush1.msra.mxu0 0.0
    %89 = vmatprep.subr.mxu0 0.0
    %90 = vmatpush1.msra.mxu0 0.0
    %91 = vmatprep.subr.mxu0 0.0
    %92 = vmatpush1.msra.mxu0 0.0
    %93 = vmatprep.subr.mxu0 0.0
    %94 = vmatpush1.msra.mxu0 0.0
    %95 = vmatprep.subr.mxu0 0.0
    %96 = vmatpush1.msra.mxu0 %v63
    %97 = vmatprep.subr.mxu0 0.0
    %98 = vmatpush2.msra.mxu0 0.0
    %99 = vmatprep.subr.mxu0 0.0
    %100 = vmatpush2.msra.mxu0 0.0
    %101 = vmatprep.subr.mxu0 0.0
    %102 = vmatpush2.msra.mxu0 0.0
    %103 = vmatprep.subr.mxu0 0.0
    %104 = vmatpush2.msra.mxu0 0.0
    %105 = vmatprep.subr.mxu0 0.0
    %106 = vmatpush2.msra.mxu0 0.0
    %107 = vmatprep.subr.mxu0 0.0
    %108 = vmatpush2.msra.mxu0 0.0
    %109 = vmatprep.subr.mxu0 0.0
    %110 = vmatpush2.msra.mxu0 0.0
    %111 = vmatprep.subr.mxu0 0.0
    %112 = vmatpush2.msra.mxu0 0.0
    %113 = vmatprep.subr.mxu0 0.0
    %114 = vmatpush2.msra.mxu0 0.0
    %115 = vmatprep.subr.mxu0 0.0
    %116 = vmatpush2.msra.mxu0 0.0
    %117 = vmatprep.subr.mxu0 0.0
    %118 = vmatpush2.msra.mxu0 0.0
    %119 = vmatprep.subr.mxu0 0.0
    %120 = vmatpush2.msra.mxu0 0.0
    %121 = vmatprep.subr.mxu0 0.0
    %122 = vmatpush2.msra.mxu0 0.0
    %123 = vmatprep.subr.mxu0 0.0
    %124 = vmatpush2.msra.mxu0 0.0
    %125 = vmatprep.subr.mxu0 0.0
    %126 = vmatpush2.msra.mxu0 0.0
    %127 = vmatprep.subr.mxu0 0.0
    %128 = vmatpush2.msra.mxu0 0.0
    %129 = vmatprep.mubr.f32.mxu0 0.0
    %130 = vmatmul.mubr.f32.gmra.mxu0 %v38
    %v131 = vpop.f32.mrf.mxu0
    %v132 = vadd.f32 %v35, %v131
    %v133 = vpop.f32.mrf.mxu0
    %134 = vmatprep.mubr.f32.mxu0 0.0
    %135 = vmatmul.mubr.f32.gmra.mxu0 %v41
    %v136 = vpop.f32.mrf.mxu0
    %v137 = vadd.f32 %v35, %v136
    %v138 = vpop.f32.mrf.mxu0
    %139 = vmatprep.mubr.f32.mxu0 0.0
    %140 = vmatmul.mubr.f32.gmra.mxu0 %v44
    %v141 = vpop.f32.mrf.mxu0
    %v142 = vadd.f32 %v35, %v141
    %v143 = vpop.f32.mrf.mxu0
    %144 = vmatprep.mubr.f32.mxu0 0.0
    %145 = vmatmul.mubr.f32.gmra.mxu0 %v47
    %v146 = vpop.f32.mrf.mxu0
    %v147 = vadd.f32 %v35, %v146
    %v148 = vpop.f32.mrf.mxu0
    %149 = vmatprep.mubr.f32.mxu0 0.0
    %150 = vmatmul.mubr.f32.gmra.mxu0 %v50
    %v151 = vpop.f32.mrf.mxu0
    %v152 = vadd.f32 %v35, %v151
    %v153 = vpop.f32.mrf.mxu0
    %154 = vmatprep.mubr.f32.mxu0 0.0
    %155 = vmatmul.mubr.f32.gmra.mxu0 %v53
    %v156 = vpop.f32.mrf.mxu0
    %v157 = vadd.f32 %v35, %v156
    %v158 = vpop.f32.mrf.mxu0
    %159 = vmatprep.mubr.f32.mxu0 0.0
    %160 = vmatmul.mubr.f32.gmra.mxu0 %v56
    %v161 = vpop.f32.mrf.mxu0
    %v162 = vadd.f32 %v35, %v161
    %v163 = vpop.f32.mrf.mxu0
    %164 = vmatprep.mubr.f32.mxu0 0.0
    %165 = vmatmul.mubr.f32.gmra.mxu0 %v59
    %v166 = vpop.f32.mrf.mxu0
    %v167 = vadd.f32 %v35, %v166
    %v168 = vpop.f32.mrf.mxu0
    %169 = vdwg.mxu0
    %vm170 = vcmask 261120
    %v172 = vsel %vm170, 0.0, 0
    %174 = vmatprep.subr.mxu0 0.0
    %175 = vmatpush1.msra.mxu0 0.0
    %176 = vmatprep.subr.mxu0 0.0
    %177 = vmatpush1.msra.mxu0 0.0
    %178 = vmatprep.subr.mxu0 0.0
    %179 = vmatpush1.msra.mxu0 0.0
    %180 = vmatprep.subr.mxu0 0.0
    %181 = vmatpush1.msra.mxu0 0.0
    %182 = vmatprep.subr.mxu0 0.0
    %183 = vmatpush1.msra.mxu0 0.0
    %184 = vmatprep.subr.mxu0 0.0
    %185 = vmatpush1.msra.mxu0 0.0
    %186 = vmatprep.subr.mxu0 0.0
    %187 = vmatpush1.msra.mxu0 0.0
    %188 = vmatprep.subr.mxu0 0.0
    %189 = vmatpush1.msra.mxu0 0.0
    %190 = vmatprep.subr.mxu0 0.0
    %191 = vmatpush1.msra.mxu0 0.0
    %192 = vmatprep.subr.mxu0 0.0
    %193 = vmatpush1.msra.mxu0 0.0
    %194 = vmatprep.subr.mxu0 0.0
    %195 = vmatpush1.msra.mxu0 0.0
    %196 = vmatprep.subr.mxu0 0.0
    %197 = vmatpush1.msra.mxu0 0.0
    %198 = vmatprep.subr.mxu0 0.0
    %199 = vmatpush1.msra.mxu0 %v22
    %200 = vmatprep.subr.mxu0 0.0
    %201 = vmatpush1.msra.mxu0 %v21
    %202 = vmatprep.subr.mxu0 0.0
    %203 = vmatpush1.msra.mxu0 %v20
    %204 = vmatprep.subr.mxu0 0.0
    %205 = vmatpush1.msra.mxu0 %v19
    %206 = vmatprep.subr.mxu0 0.0
    %207 = vmatpush2.msra.mxu0 0.0
    %208 = vmatprep.subr.mxu0 0.0
    %209 = vmatpush2.msra.mxu0 0.0
    %210 = vmatprep.subr.mxu0 0.0
    %211 = vmatpush2.msra.mxu0 0.0
    %212 = vmatprep.subr.mxu0 0.0
    %213 = vmatpush2.msra.mxu0 0.0
    %214 = vmatprep.subr.mxu0 0.0
    %215 = vmatpush2.msra.mxu0 0.0
    %216 = vmatprep.subr.mxu0 0.0
    %217 = vmatpush2.msra.mxu0 0.0
    %218 = vmatprep.subr.mxu0 0.0
    %219 = vmatpush2.msra.mxu0 0.0
    %220 = vmatprep.subr.mxu0 0.0
    %221 = vmatpush2.msra.mxu0 0.0
    %222 = vmatprep.subr.mxu0 0.0
    %223 = vmatpush2.msra.mxu0 0.0
    %224 = vmatprep.subr.mxu0 0.0
    %225 = vmatpush2.msra.mxu0 0.0
    %226 = vmatprep.subr.mxu0 0.0
    %227 = vmatpush2.msra.mxu0 0.0
    %228 = vmatprep.subr.mxu0 0.0
    %229 = vmatpush2.msra.mxu0 0.0
    %230 = vmatprep.subr.mxu0 0.0
    %231 = vmatpush2.msra.mxu0 0.0
    %232 = vmatprep.subr.mxu0 0.0
    %233 = vmatpush2.msra.mxu0 0.0
    %234 = vmatprep.subr.mxu0 0.0
    %235 = vmatpush2.msra.mxu0 0.0
    %236 = vmatprep.subr.mxu0 0.0
    %237 = vmatpush2.msra.mxu0 0.0
    %238 = vmatprep.mubr.f32.mxu0 0.0
    %239 = vmatmul.mubr.f32.gmra.mxu0 %v172
    %v240 = vpop.f32.mrf.mxu0
    %v241 = vadd.f32 0.0, %v240
    %v242 = vpop.f32.mrf.mxu0
    %243 = vdwg.mxu0
    %v244 = vadd.f32 %v132, %v241
    %v245 = vxor.u32 %v244, 2147483648
    %v246 = vmul.f32 %v245, 1.442695
    %v247 = vpow.pop %v246
    %v248 = vadd.f32 %v247, 1.0
    %v249 = vrcp.pop %v248
    %v250 = vmul.f32 1.0, %v249
    %v251 = vtanh.pop %v244
    %v252 = vmul.f32 %v250, 0.0
    %254 = vrot.lane.b32.xlu0 %v251, 64
    %v255 = vpop.permute.xlu0 %254
    %v257 = vmul.f32 %v250, %v255
    %259 = vrot.lane.b32.xlu0 %v257, 32
    %v260 = vpop.permute.xlu0 %259
    %v262 = vadd.f32 %v252, %v260
    %v263 = vtanh.pop %v262
    %265 = vrot.lane.b32.xlu0 %v263, 64
    %v266 = vpop.permute.xlu0 %265
    %v268 = vmul.f32 %v250, %v266
    %270 = vrot.lane.b32.xlu0 %v268, 32
    %v271 = vpop.permute.xlu0 %270
    %v272 = vsel %vm170, %v271, 0
    %274 = vmatprep.subr.mxu0 0.0
    %275 = vmatpush1.msra.mxu0 0.0
    %276 = vmatprep.subr.mxu0 0.0
    %277 = vmatpush1.msra.mxu0 0.0
    %278 = vmatprep.subr.mxu0 0.0
    %279 = vmatpush1.msra.mxu0 0.0
    %280 = vmatprep.subr.mxu0 0.0
    %281 = vmatpush1.msra.mxu0 0.0
    %282 = vmatprep.subr.mxu0 0.0
    %283 = vmatpush1.msra.mxu0 0.0
    %284 = vmatprep.subr.mxu0 0.0
    %285 = vmatpush1.msra.mxu0 0.0
    %286 = vmatprep.subr.mxu0 0.0
    %287 = vmatpush1.msra.mxu0 0.0
    %288 = vmatprep.subr.mxu0 0.0
    %289 = vmatpush1.msra.mxu0 0.0
    %290 = vmatprep.subr.mxu0 0.0
    %291 = vmatpush1.msra.mxu0 0.0
    %292 = vmatprep.subr.mxu0 0.0
    %293 = vmatpush1.msra.mxu0 0.0
    %294 = vmatprep.subr.mxu0 0.0
    %295 = vmatpush1.msra.mxu0 0.0
    %296 = vmatprep.subr.mxu0 0.0
    %297 = vmatpush1.msra.mxu0 0.0
    %298 = vmatprep.subr.mxu0 0.0
    %299 = vmatpush1.msra.mxu0 %v22
    %300 = vmatprep.subr.mxu0 0.0
    %301 = vmatpush1.msra.mxu0 %v21
    %302 = vmatprep.subr.mxu0 0.0
    %303 = vmatpush1.msra.mxu0 %v20
    %304 = vmatprep.subr.mxu0 0.0
    %305 = vmatpush1.msra.mxu0 %v19
    %306 = vmatprep.subr.mxu0 0.0
    %307 = vmatpush2.msra.mxu0 0.0
    %308 = vmatprep.subr.mxu0 0.0
    %309 = vmatpush2.msra.mxu0 0.0
    %310 = vmatprep.subr.mxu0 0.0
    %311 = vmatpush2.msra.mxu0 0.0
    %312 = vmatprep.subr.mxu0 0.0
    %313 = vmatpush2.msra.mxu0 0.0
    %314 = vmatprep.subr.mxu0 0.0
    %315 = vmatpush2.msra.mxu0 0.0
    %316 = vmatprep.subr.mxu0 0.0
    %317 = vmatpush2.msra.mxu0 0.0
    %318 = vmatprep.subr.mxu0 0.0
    %319 = vmatpush2.msra.mxu0 0.0
    %320 = vmatprep.subr.mxu0 0.0
    %321 = vmatpush2.msra.mxu0 0.0
    %322 = vmatprep.subr.mxu0 0.0
    %323 = vmatpush2.msra.mxu0 0.0
    %324 = vmatprep.subr.mxu0 0.0
    %325 = vmatpush2.msra.mxu0 0.0
    %326 = vmatprep.subr.mxu0 0.0
    %327 = vmatpush2.msra.mxu0 0.0
    %328 = vmatprep.subr.mxu0 0.0
    %329 = vmatpush2.msra.mxu0 0.0
    %330 = vmatprep.subr.mxu0 0.0
    %331 = vmatpush2.msra.mxu0 0.0
    %332 = vmatprep.subr.mxu0 0.0
    %333 = vmatpush2.msra.mxu0 0.0
    %334 = vmatprep.subr.mxu0 0.0
    %335 = vmatpush2.msra.mxu0 0.0
    %336 = vmatprep.subr.mxu0 0.0
    %337 = vmatpush2.msra.mxu0 0.0
    %338 = vmatprep.mubr.f32.mxu0 0.0
    %339 = vmatmul.mubr.f32.gmra.mxu0 %v272
    %v340 = vpop.f32.mrf.mxu0
    %v341 = vadd.f32 0.0, %v340
    %v342 = vpop.f32.mrf.mxu0
    %343 = vdwg.mxu0
    %v344 = vadd.f32 %v137, %v341
    %v345 = vxor.u32 %v344, 2147483648
    %v346 = vmul.f32 %v345, 1.442695
    %v347 = vpow.pop %v346
    %v348 = vadd.f32 %v347, 1.0
    %v349 = vrcp.pop %v348
    %v350 = vmul.f32 1.0, %v349
    %v351 = vtanh.pop %v344
    %v352 = vmul.f32 %v350, %v262
    %354 = vrot.lane.b32.xlu0 %v351, 64
    %v355 = vpop.permute.xlu0 %354
    %v357 = vmul.f32 %v350, %v355
    %359 = vrot.lane.b32.xlu0 %v357, 32
    %v360 = vpop.permute.xlu0 %359
    %v362 = vadd.f32 %v352, %v360
    %v363 = vtanh.pop %v362
    %365 = vrot.lane.b32.xlu0 %v363, 64
    %v366 = vpop.permute.xlu0 %365
    %v368 = vmul.f32 %v350, %v366
    %370 = vrot.lane.b32.xlu0 %v368, 32
    %v371 = vpop.permute.xlu0 %370
    %v372 = vsel %vm170, %v371, 0
    %374 = vmatprep.subr.mxu0 0.0
    %375 = vmatpush1.msra.mxu0 0.0
    %376 = vmatprep.subr.mxu0 0.0
    %377 = vmatpush1.msra.mxu0 0.0
    %378 = vmatprep.subr.mxu0 0.0
    %379 = vmatpush1.msra.mxu0 0.0
    %380 = vmatprep.subr.mxu0 0.0
    %381 = vmatpush1.msra.mxu0 0.0
    %382 = vmatprep.subr.mxu0 0.0
    %383 = vmatpush1.msra.mxu0 0.0
    %384 = vmatprep.subr.mxu0 0.0
    %385 = vmatpush1.msra.mxu0 0.0
    %386 = vmatprep.subr.mxu0 0.0
    %387 = vmatpush1.msra.mxu0 0.0
    %388 = vmatprep.subr.mxu0 0.0
    %389 = vmatpush1.msra.mxu0 0.0
    %390 = vmatprep.subr.mxu0 0.0
    %391 = vmatpush1.msra.mxu0 0.0
    %392 = vmatprep.subr.mxu0 0.0
    %393 = vmatpush1.msra.mxu0 0.0
    %394 = vmatprep.subr.mxu0 0.0
    %395 = vmatpush1.msra.mxu0 0.0
    %396 = vmatprep.subr.mxu0 0.0
    %397 = vmatpush1.msra.mxu0 0.0
    %398 = vmatprep.subr.mxu0 0.0
    %399 = vmatpush1.msra.mxu0 %v22
    %400 = vmatprep.subr.mxu0 0.0
    %401 = vmatpush1.msra.mxu0 %v21
    %402 = vmatprep.subr.mxu0 0.0
    %403 = vmatpush1.msra.mxu0 %v20
    %404 = vmatprep.subr.mxu0 0.0
    %405 = vmatpush1.msra.mxu0 %v19
    %406 = vmatprep.subr.mxu0 0.0
    %407 = vmatpush2.msra.mxu0 0.0
    %408 = vmatprep.subr.mxu0 0.0
    %409 = vmatpush2.msra.mxu0 0.0
    %410 = vmatprep.subr.mxu0 0.0
    %411 = vmatpush2.msra.mxu0 0.0
    %412 = vmatprep.subr.mxu0 0.0
    %413 = vmatpush2.msra.mxu0 0.0
    %414 = vmatprep.subr.mxu0 0.0
    %415 = vmatpush2.msra.mxu0 0.0
    %416 = vmatprep.subr.mxu0 0.0
    %417 = vmatpush2.msra.mxu0 0.0
    %418 = vmatprep.subr.mxu0 0.0
    %419 = vmatpush2.msra.mxu0 0.0
    %420 = vmatprep.subr.mxu0 0.0
    %421 = vmatpush2.msra.mxu0 0.0
    %422 = vmatprep.subr.mxu0 0.0
    %423 = vmatpush2.msra.mxu0 0.0
    %424 = vmatprep.subr.mxu0 0.0
    %425 = vmatpush2.msra.mxu0 0.0
    %426 = vmatprep.subr.mxu0 0.0
    %427 = vmatpush2.msra.mxu0 0.0
    %428 = vmatprep.subr.mxu0 0.0
    %429 = vmatpush2.msra.mxu0 0.0
    %430 = vmatprep.subr.mxu0 0.0
    %431 = vmatpush2.msra.mxu0 0.0
    %432 = vmatprep.subr.mxu0 0.0
    %433 = vmatpush2.msra.mxu0 0.0
    %434 = vmatprep.subr.mxu0 0.0
    %435 = vmatpush2.msra.mxu0 0.0
    %436 = vmatprep.subr.mxu0 0.0
    %437 = vmatpush2.msra.mxu0 0.0
    %438 = vmatprep.mubr.f32.mxu0 0.0
    %439 = vmatmul.mubr.f32.gmra.mxu0 %v372
    %v440 = vpop.f32.mrf.mxu0
    %v441 = vadd.f32 0.0, %v440
    %v442 = vpop.f32.mrf.mxu0
    %443 = vdwg.mxu0
    %v444 = vadd.f32 %v142, %v441
    %v445 = vxor.u32 %v444, 2147483648
    %v446 = vmul.f32 %v445, 1.442695
    %v447 = vpow.pop %v446
    %v448 = vadd.f32 %v447, 1.0
    %v449 = vrcp.pop %v448
    %v450 = vmul.f32 1.0, %v449
    %v451 = vtanh.pop %v444
    %v452 = vmul.f32 %v450, %v362
    %454 = vrot.lane.b32.xlu0 %v451, 64
    %v455 = vpop.permute.xlu0 %454
    %v457 = vmul.f32 %v450, %v455
    %459 = vrot.lane.b32.xlu0 %v457, 32
    %v460 = vpop.permute.xlu0 %459
    %v462 = vadd.f32 %v452, %v460
    %v463 = vtanh.pop %v462
    %465 = vrot.lane.b32.xlu0 %v463, 64
    %v466 = vpop.permute.xlu0 %465
    %v468 = vmul.f32 %v450, %v466
    %470 = vrot.lane.b32.xlu0 %v468, 32
    %v471 = vpop.permute.xlu0 %470
    %v472 = vsel %vm170, %v471, 0
    %474 = vmatprep.subr.mxu0 0.0
    %475 = vmatpush1.msra.mxu0 0.0
    %476 = vmatprep.subr.mxu0 0.0
    %477 = vmatpush1.msra.mxu0 0.0
    %478 = vmatprep.subr.mxu0 0.0
    %479 = vmatpush1.msra.mxu0 0.0
    %480 = vmatprep.subr.mxu0 0.0
    %481 = vmatpush1.msra.mxu0 0.0
    %482 = vmatprep.subr.mxu0 0.0
    %483 = vmatpush1.msra.mxu0 0.0
    %484 = vmatprep.subr.mxu0 0.0
    %485 = vmatpush1.msra.mxu0 0.0
    %486 = vmatprep.subr.mxu0 0.0
    %487 = vmatpush1.msra.mxu0 0.0
    %488 = vmatprep.subr.mxu0 0.0
    %489 = vmatpush1.msra.mxu0 0.0
    %490 = vmatprep.subr.mxu0 0.0
    %491 = vmatpush1.msra.mxu0 0.0
    %492 = vmatprep.subr.mxu0 0.0
    %493 = vmatpush1.msra.mxu0 0.0
    %494 = vmatprep.subr.mxu0 0.0
    %495 = vmatpush1.msra.mxu0 0.0
    %496 = vmatprep.subr.mxu0 0.0
    %497 = vmatpush1.msra.mxu0 0.0
    %498 = vmatprep.subr.mxu0 0.0
    %499 = vmatpush1.msra.mxu0 %v22
    %500 = vmatprep.subr.mxu0 0.0
    %501 = vmatpush1.msra.mxu0 %v21
    %502 = vmatprep.subr.mxu0 0.0
    %503 = vmatpush1.msra.mxu0 %v20
    %504 = vmatprep.subr.mxu0 0.0
    %505 = vmatpush1.msra.mxu0 %v19
    %506 = vmatprep.subr.mxu0 0.0
    %507 = vmatpush2.msra.mxu0 0.0
    %508 = vmatprep.subr.mxu0 0.0
    %509 = vmatpush2.msra.mxu0 0.0
    %510 = vmatprep.subr.mxu0 0.0
    %511 = vmatpush2.msra.mxu0 0.0
    %512 = vmatprep.subr.mxu0 0.0
    %513 = vmatpush2.msra.mxu0 0.0
    %514 = vmatprep.subr.mxu0 0.0
    %515 = vmatpush2.msra.mxu0 0.0
    %516 = vmatprep.subr.mxu0 0.0
    %517 = vmatpush2.msra.mxu0 0.0
    %518 = vmatprep.subr.mxu0 0.0
    %519 = vmatpush2.msra.mxu0 0.0
    %520 = vmatprep.subr.mxu0 0.0
    %521 = vmatpush2.msra.mxu0 0.0
    %522 = vmatprep.subr.mxu0 0.0
    %523 = vmatpush2.msra.mxu0 0.0
    %524 = vmatprep.subr.mxu0 0.0
    %525 = vmatpush2.msra.mxu0 0.0
    %526 = vmatprep.subr.mxu0 0.0
    %527 = vmatpush2.msra.mxu0 0.0
    %528 = vmatprep.subr.mxu0 0.0
    %529 = vmatpush2.msra.mxu0 0.0
    %530 = vmatprep.subr.mxu0 0.0
    %531 = vmatpush2.msra.mxu0 0.0
    %532 = vmatprep.subr.mxu0 0.0
    %533 = vmatpush2.msra.mxu0 0.0
    %534 = vmatprep.subr.mxu0 0.0
    %535 = vmatpush2.msra.mxu0 0.0
    %536 = vmatprep.subr.mxu0 0.0
    %537 = vmatpush2.msra.mxu0 0.0
    %538 = vmatprep.mubr.f32.mxu0 0.0
    %539 = vmatmul.mubr.f32.gmra.mxu0 %v472
    %v540 = vpop.f32.mrf.mxu0
    %v541 = vadd.f32 0.0, %v540
    %v542 = vpop.f32.mrf.mxu0
    %543 = vdwg.mxu0
    %v544 = vadd.f32 %v147, %v541
    %v545 = vxor.u32 %v544, 2147483648
    %v546 = vmul.f32 %v545, 1.442695
    %v547 = vpow.pop %v546
    %v548 = vadd.f32 %v547, 1.0
    %v549 = vrcp.pop %v548
    %v550 = vmul.f32 1.0, %v549
    %v551 = vtanh.pop %v544
    %v552 = vmul.f32 %v550, %v462
    %554 = vrot.lane.b32.xlu0 %v551, 64
    %v555 = vpop.permute.xlu0 %554
    %v557 = vmul.f32 %v550, %v555
    %559 = vrot.lane.b32.xlu0 %v557, 32
    %v560 = vpop.permute.xlu0 %559
    %v562 = vadd.f32 %v552, %v560
    %v563 = vtanh.pop %v562
    %565 = vrot.lane.b32.xlu0 %v563, 64
    %v566 = vpop.permute.xlu0 %565
    %v568 = vmul.f32 %v550, %v566
    %570 = vrot.lane.b32.xlu0 %v568, 32
    %v571 = vpop.permute.xlu0 %570
    %v572 = vsel %vm170, %v571, 0
    %574 = vmatprep.subr.mxu0 0.0
    %575 = vmatpush1.msra.mxu0 0.0
    %576 = vmatprep.subr.mxu0 0.0
    %577 = vmatpush1.msra.mxu0 0.0
    %578 = vmatprep.subr.mxu0 0.0
    %579 = vmatpush1.msra.mxu0 0.0
    %580 = vmatprep.subr.mxu0 0.0
    %581 = vmatpush1.msra.mxu0 0.0
    %582 = vmatprep.subr.mxu0 0.0
    %583 = vmatpush1.msra.mxu0 0.0
    %584 = vmatprep.subr.mxu0 0.0
    %585 = vmatpush1.msra.mxu0 0.0
    %586 = vmatprep.subr.mxu0 0.0
    %587 = vmatpush1.msra.mxu0 0.0
    %588 = vmatprep.subr.mxu0 0.0
    %589 = vmatpush1.msra.mxu0 0.0
    %590 = vmatprep.subr.mxu0 0.0
    %591 = vmatpush1.msra.mxu0 0.0
    %592 = vmatprep.subr.mxu0 0.0
    %593 = vmatpush1.msra.mxu0 0.0
    %594 = vmatprep.subr.mxu0 0.0
    %595 = vmatpush1.msra.mxu0 0.0
    %596 = vmatprep.subr.mxu0 0.0
    %597 = vmatpush1.msra.mxu0 0.0
    %598 = vmatprep.subr.mxu0 0.0
    %599 = vmatpush1.msra.mxu0 %v22
    %600 = vmatprep.subr.mxu0 0.0
    %601 = vmatpush1.msra.mxu0 %v21
    %602 = vmatprep.subr.mxu0 0.0
    %603 = vmatpush1.msra.mxu0 %v20
    %604 = vmatprep.subr.mxu0 0.0
    %605 = vmatpush1.msra.mxu0 %v19
    %606 = vmatprep.subr.mxu0 0.0
    %607 = vmatpush2.msra.mxu0 0.0
    %608 = vmatprep.subr.mxu0 0.0
    %609 = vmatpush2.msra.mxu0 0.0
    %610 = vmatprep.subr.mxu0 0.0
    %611 = vmatpush2.msra.mxu0 0.0
    %612 = vmatprep.subr.mxu0 0.0
    %613 = vmatpush2.msra.mxu0 0.0
    %614 = vmatprep.subr.mxu0 0.0
    %615 = vmatpush2.msra.mxu0 0.0
    %616 = vmatprep.subr.mxu0 0.0
    %617 = vmatpush2.msra.mxu0 0.0
    %618 = vmatprep.subr.mxu0 0.0
    %619 = vmatpush2.msra.mxu0 0.0
    %620 = vmatprep.subr.mxu0 0.0
    %621 = vmatpush2.msra.mxu0 0.0
    %622 = vmatprep.subr.mxu0 0.0
    %623 = vmatpush2.msra.mxu0 0.0
    %624 = vmatprep.subr.mxu0 0.0
    %625 = vmatpush2.msra.mxu0 0.0
    %626 = vmatprep.subr.mxu0 0.0
    %627 = vmatpush2.msra.mxu0 0.0
    %628 = vmatprep.subr.mxu0 0.0
    %629 = vmatpush2.msra.mxu0 0.0
    %630 = vmatprep.subr.mxu0 0.0
    %631 = vmatpush2.msra.mxu0 0.0
    %632 = vmatprep.subr.mxu0 0.0
    %633 = vmatpush2.msra.mxu0 0.0
    %634 = vmatprep.subr.mxu0 0.0
    %635 = vmatpush2.msra.mxu0 0.0
    %636 = vmatprep.subr.mxu0 0.0
    %637 = vmatpush2.msra.mxu0 0.0
    %638 = vmatprep.mubr.f32.mxu0 0.0
    %639 = vmatmul.mubr.f32.gmra.mxu0 %v572
    %v640 = vpop.f32.mrf.mxu0
    %v641 = vadd.f32 0.0, %v640
    %v642 = vpop.f32.mrf.mxu0
    %643 = vdwg.mxu0
    %v644 = vadd.f32 %v152, %v641
    %v645 = vxor.u32 %v644, 2147483648
    %v646 = vmul.f32 %v645, 1.442695
    %v647 = vpow.pop %v646
    %v648 = vadd.f32 %v647, 1.0
    %v649 = vrcp.pop %v648
    %v650 = vmul.f32 1.0, %v649
    %v651 = vtanh.pop %v644
    %v652 = vmul.f32 %v650, %v562
    %654 = vrot.lane.b32.xlu0 %v651, 64
    %v655 = vpop.permute.xlu0 %654
    %v657 = vmul.f32 %v650, %v655
    %659 = vrot.lane.b32.xlu0 %v657, 32
    %v660 = vpop.permute.xlu0 %659
    %v662 = vadd.f32 %v652, %v660
    %v663 = vtanh.pop %v662
    %665 = vrot.lane.b32.xlu0 %v663, 64
    %v666 = vpop.permute.xlu0 %665
    %v668 = vmul.f32 %v650, %v666
    %670 = vrot.lane.b32.xlu0 %v668, 32
    %v671 = vpop.permute.xlu0 %670
    %v672 = vsel %vm170, %v671, 0
    %674 = vmatprep.subr.mxu0 0.0
    %675 = vmatpush1.msra.mxu0 0.0
    %676 = vmatprep.subr.mxu0 0.0
    %677 = vmatpush1.msra.mxu0 0.0
    %678 = vmatprep.subr.mxu0 0.0
    %679 = vmatpush1.msra.mxu0 0.0
    %680 = vmatprep.subr.mxu0 0.0
    %681 = vmatpush1.msra.mxu0 0.0
    %682 = vmatprep.subr.mxu0 0.0
    %683 = vmatpush1.msra.mxu0 0.0
    %684 = vmatprep.subr.mxu0 0.0
    %685 = vmatpush1.msra.mxu0 0.0
    %686 = vmatprep.subr.mxu0 0.0
    %687 = vmatpush1.msra.mxu0 0.0
    %688 = vmatprep.subr.mxu0 0.0
    %689 = vmatpush1.msra.mxu0 0.0
    %690 = vmatprep.subr.mxu0 0.0
    %691 = vmatpush1.msra.mxu0 0.0
    %692 = vmatprep.subr.mxu0 0.0
    %693 = vmatpush1.msra.mxu0 0.0
    %694 = vmatprep.subr.mxu0 0.0
    %695 = vmatpush1.msra.mxu0 0.0
    %696 = vmatprep.subr.mxu0 0.0
    %697 = vmatpush1.msra.mxu0 0.0
    %698 = vmatprep.subr.mxu0 0.0
    %699 = vmatpush1.msra.mxu0 %v22
    %700 = vmatprep.subr.mxu0 0.0
    %701 = vmatpush1.msra.mxu0 %v21
    %702 = vmatprep.subr.mxu0 0.0
    %703 = vmatpush1.msra.mxu0 %v20
    %704 = vmatprep.subr.mxu0 0.0
    %705 = vmatpush1.msra.mxu0 %v19
    %706 = vmatprep.subr.mxu0 0.0
    %707 = vmatpush2.msra.mxu0 0.0
    %708 = vmatprep.subr.mxu0 0.0
    %709 = vmatpush2.msra.mxu0 0.0
    %710 = vmatprep.subr.mxu0 0.0
    %711 = vmatpush2.msra.mxu0 0.0
    %712 = vmatprep.subr.mxu0 0.0
    %713 = vmatpush2.msra.mxu0 0.0
    %714 = vmatprep.subr.mxu0 0.0
    %715 = vmatpush2.msra.mxu0 0.0
    %716 = vmatprep.subr.mxu0 0.0
    %717 = vmatpush2.msra.mxu0 0.0
    %718 = vmatprep.subr.mxu0 0.0
    %719 = vmatpush2.msra.mxu0 0.0
    %720 = vmatprep.subr.mxu0 0.0
    %721 = vmatpush2.msra.mxu0 0.0
    %722 = vmatprep.subr.mxu0 0.0
    %723 = vmatpush2.msra.mxu0 0.0
    %724 = vmatprep.subr.mxu0 0.0
    %725 = vmatpush2.msra.mxu0 0.0
    %726 = vmatprep.subr.mxu0 0.0
    %727 = vmatpush2.msra.mxu0 0.0
    %728 = vmatprep.subr.mxu0 0.0
    %729 = vmatpush2.msra.mxu0 0.0
    %730 = vmatprep.subr.mxu0 0.0
    %731 = vmatpush2.msra.mxu0 0.0
    %732 = vmatprep.subr.mxu0 0.0
    %733 = vmatpush2.msra.mxu0 0.0
    %734 = vmatprep.subr.mxu0 0.0
    %735 = vmatpush2.msra.mxu0 0.0
    %736 = vmatprep.subr.mxu0 0.0
    %737 = vmatpush2.msra.mxu0 0.0
    %738 = vmatprep.mubr.f32.mxu0 0.0
    %739 = vmatmul.mubr.f32.gmra.mxu0 %v672
    %v740 = vpop.f32.mrf.mxu0
    %v741 = vadd.f32 0.0, %v740
    %v742 = vpop.f32.mrf.mxu0
    %743 = vdwg.mxu0
    %v744 = vadd.f32 %v157, %v741
    %v745 = vxor.u32 %v744, 2147483648
    %v746 = vmul.f32 %v745, 1.442695
    %v747 = vpow.pop %v746
    %v748 = vadd.f32 %v747, 1.0
    %v749 = vrcp.pop %v748
    %v750 = vmul.f32 1.0, %v749
    %v751 = vtanh.pop %v744
    %v752 = vmul.f32 %v750, %v662
    %754 = vrot.lane.b32.xlu0 %v751, 64
    %v755 = vpop.permute.xlu0 %754
    %v757 = vmul.f32 %v750, %v755
    %759 = vrot.lane.b32.xlu0 %v757, 32
    %v760 = vpop.permute.xlu0 %759
    %v762 = vadd.f32 %v752, %v760
    %v763 = vtanh.pop %v762
    %765 = vrot.lane.b32.xlu0 %v763, 64
    %v766 = vpop.permute.xlu0 %765
    %v768 = vmul.f32 %v750, %v766
    %770 = vrot.lane.b32.xlu0 %v768, 32
    %v771 = vpop.permute.xlu0 %770
    %v772 = vsel %vm170, %v771, 0
    %774 = vmatprep.subr.mxu0 0.0
    %775 = vmatpush1.msra.mxu0 0.0
    %776 = vmatprep.subr.mxu0 0.0
    %777 = vmatpush1.msra.mxu0 0.0
    %778 = vmatprep.subr.mxu0 0.0
    %779 = vmatpush1.msra.mxu0 0.0
    %780 = vmatprep.subr.mxu0 0.0
    %781 = vmatpush1.msra.mxu0 0.0
    %782 = vmatprep.subr.mxu0 0.0
    %783 = vmatpush1.msra.mxu0 0.0
    %784 = vmatprep.subr.mxu0 0.0
    %785 = vmatpush1.msra.mxu0 0.0
    %786 = vmatprep.subr.mxu0 0.0
    %787 = vmatpush1.msra.mxu0 0.0
    %788 = vmatprep.subr.mxu0 0.0
    %789 = vmatpush1.msra.mxu0 0.0
    %790 = vmatprep.subr.mxu0 0.0
    %791 = vmatpush1.msra.mxu0 0.0
    %792 = vmatprep.subr.mxu0 0.0
    %793 = vmatpush1.msra.mxu0 0.0
    %794 = vmatprep.subr.mxu0 0.0
    %795 = vmatpush1.msra.mxu0 0.0
    %796 = vmatprep.subr.mxu0 0.0
    %797 = vmatpush1.msra.mxu0 0.0
    %798 = vmatprep.subr.mxu0 0.0
    %799 = vmatpush1.msra.mxu0 %v22
    %800 = vmatprep.subr.mxu0 0.0
    %801 = vmatpush1.msra.mxu0 %v21
    %802 = vmatprep.subr.mxu0 0.0
    %803 = vmatpush1.msra.mxu0 %v20
    %804 = vmatprep.subr.mxu0 0.0
    %805 = vmatpush1.msra.mxu0 %v19
    %806 = vmatprep.subr.mxu0 0.0
    %807 = vmatpush2.msra.mxu0 0.0
    %808 = vmatprep.subr.mxu0 0.0
    %809 = vmatpush2.msra.mxu0 0.0
    %810 = vmatprep.subr.mxu0 0.0
    %811 = vmatpush2.msra.mxu0 0.0
    %812 = vmatprep.subr.mxu0 0.0
    %813 = vmatpush2.msra.mxu0 0.0
    %814 = vmatprep.subr.mxu0 0.0
    %815 = vmatpush2.msra.mxu0 0.0
    %816 = vmatprep.subr.mxu0 0.0
    %817 = vmatpush2.msra.mxu0 0.0
    %818 = vmatprep.subr.mxu0 0.0
    %819 = vmatpush2.msra.mxu0 0.0
    %820 = vmatprep.subr.mxu0 0.0
    %821 = vmatpush2.msra.mxu0 0.0
    %822 = vmatprep.subr.mxu0 0.0
    %823 = vmatpush2.msra.mxu0 0.0
    %824 = vmatprep.subr.mxu0 0.0
    %825 = vmatpush2.msra.mxu0 0.0
    %826 = vmatprep.subr.mxu0 0.0
    %827 = vmatpush2.msra.mxu0 0.0
    %828 = vmatprep.subr.mxu0 0.0
    %829 = vmatpush2.msra.mxu0 0.0
    %830 = vmatprep.subr.mxu0 0.0
    %831 = vmatpush2.msra.mxu0 0.0
    %832 = vmatprep.subr.mxu0 0.0
    %833 = vmatpush2.msra.mxu0 0.0
    %834 = vmatprep.subr.mxu0 0.0
    %835 = vmatpush2.msra.mxu0 0.0
    %836 = vmatprep.subr.mxu0 0.0
    %837 = vmatpush2.msra.mxu0 0.0
    %838 = vmatprep.mubr.f32.mxu0 0.0
    %839 = vmatmul.mubr.f32.gmra.mxu0 %v772
    %v840 = vpop.f32.mrf.mxu0
    %v841 = vadd.f32 0.0, %v840
    %v842 = vpop.f32.mrf.mxu0
    %843 = vdwg.mxu0
    %v844 = vadd.f32 %v162, %v841
    %v845 = vxor.u32 %v844, 2147483648
    %v846 = vmul.f32 %v845, 1.442695
    %v847 = vpow.pop %v846
    %v848 = vadd.f32 %v847, 1.0
    %v849 = vrcp.pop %v848
    %v850 = vmul.f32 1.0, %v849
    %v851 = vtanh.pop %v844
    %v852 = vmul.f32 %v850, %v762
    %854 = vrot.lane.b32.xlu0 %v851, 64
    %v855 = vpop.permute.xlu0 %854
    %v857 = vmul.f32 %v850, %v855
    %859 = vrot.lane.b32.xlu0 %v857, 32
    %v860 = vpop.permute.xlu0 %859
    %v862 = vadd.f32 %v852, %v860
    %v863 = vtanh.pop %v862
    %865 = vrot.lane.b32.xlu0 %v863, 64
    %v866 = vpop.permute.xlu0 %865
    %v868 = vmul.f32 %v850, %v866
    %870 = vrot.lane.b32.xlu0 %v868, 32
    %v871 = vpop.permute.xlu0 %870
    %v872 = vsel %vm170, %v871, 0
    %874 = vmatprep.subr.mxu0 0.0
    %875 = vmatpush1.msra.mxu0 0.0
    %876 = vmatprep.subr.mxu0 0.0
    %877 = vmatpush1.msra.mxu0 0.0
    %878 = vmatprep.subr.mxu0 0.0
    %879 = vmatpush1.msra.mxu0 0.0
    %880 = vmatprep.subr.mxu0 0.0
    %881 = vmatpush1.msra.mxu0 0.0
    %882 = vmatprep.subr.mxu0 0.0
    %883 = vmatpush1.msra.mxu0 0.0
    %884 = vmatprep.subr.mxu0 0.0
    %885 = vmatpush1.msra.mxu0 0.0
    %886 = vmatprep.subr.mxu0 0.0
    %887 = vmatpush1.msra.mxu0 0.0
    %888 = vmatprep.subr.mxu0 0.0
    %889 = vmatpush1.msra.mxu0 0.0
    %890 = vmatprep.subr.mxu0 0.0
    %891 = vmatpush1.msra.mxu0 0.0
    %892 = vmatprep.subr.mxu0 0.0
    %893 = vmatpush1.msra.mxu0 0.0
    %894 = vmatprep.subr.mxu0 0.0
    %895 = vmatpush1.msra.mxu0 0.0
    %896 = vmatprep.subr.mxu0 0.0
    %897 = vmatpush1.msra.mxu0 0.0
    %898 = vmatprep.subr.mxu0 0.0
    %899 = vmatpush1.msra.mxu0 %v22
    %900 = vmatprep.subr.mxu0 0.0
    %901 = vmatpush1.msra.mxu0 %v21
    %902 = vmatprep.subr.mxu0 0.0
    %903 = vmatpush1.msra.mxu0 %v20
    %904 = vmatprep.subr.mxu0 0.0
    %905 = vmatpush1.msra.mxu0 %v19
    %906 = vmatprep.subr.mxu0 0.0
    %907 = vmatpush2.msra.mxu0 0.0
    %908 = vmatprep.subr.mxu0 0.0
    %909 = vmatpush2.msra.mxu0 0.0
    %910 = vmatprep.subr.mxu0 0.0
    %911 = vmatpush2.msra.mxu0 0.0
    %912 = vmatprep.subr.mxu0 0.0
    %913 = vmatpush2.msra.mxu0 0.0
    %914 = vmatprep.subr.mxu0 0.0
    %915 = vmatpush2.msra.mxu0 0.0
    %916 = vmatprep.subr.mxu0 0.0
    %917 = vmatpush2.msra.mxu0 0.0
    %918 = vmatprep.subr.mxu0 0.0
    %919 = vmatpush2.msra.mxu0 0.0
    %920 = vmatprep.subr.mxu0 0.0
    %921 = vmatpush2.msra.mxu0 0.0
    %922 = vmatprep.subr.mxu0 0.0
    %923 = vmatpush2.msra.mxu0 0.0
    %924 = vmatprep.subr.mxu0 0.0
    %925 = vmatpush2.msra.mxu0 0.0
    %926 = vmatprep.subr.mxu0 0.0
    %927 = vmatpush2.msra.mxu0 0.0
    %928 = vmatprep.subr.mxu0 0.0
    %929 = vmatpush2.msra.mxu0 0.0
    %930 = vmatprep.subr.mxu0 0.0
    %931 = vmatpush2.msra.mxu0 0.0
    %932 = vmatprep.subr.mxu0 0.0
    %933 = vmatpush2.msra.mxu0 0.0
    %934 = vmatprep.subr.mxu0 0.0
    %935 = vmatpush2.msra.mxu0 0.0
    %936 = vmatprep.subr.mxu0 0.0
    %937 = vmatpush2.msra.mxu0 0.0
    %938 = vmatprep.mubr.f32.mxu0 0.0
    %939 = vmatmul.mubr.f32.gmra.mxu0 %v872
    %v940 = vpop.f32.mrf.mxu0
    %v941 = vadd.f32 0.0, %v940
    %v942 = vpop.f32.mrf.mxu0
    %943 = vdwg.mxu0
    %v944 = vadd.f32 %v167, %v941
    %v945 = vxor.u32 %v944, 2147483648
    %v946 = vmul.f32 %v945, 1.442695
    %v947 = vpow.pop %v946
    %v948 = vadd.f32 %v947, 1.0
    %v949 = vrcp.pop %v948
    %v950 = vmul.f32 1.0, %v949
    %v951 = vtanh.pop %v944
    %v952 = vmul.f32 %v950, %v862
    %954 = vrot.lane.b32.xlu0 %v951, 64
    %v955 = vpop.permute.xlu0 %954
    %v957 = vmul.f32 %v950, %v955
    %959 = vrot.lane.b32.xlu0 %v957, 32
    %v960 = vpop.permute.xlu0 %959
    %v962 = vadd.f32 %v952, %v960
    %v963 = vtanh.pop %v962
    %965 = vrot.lane.b32.xlu0 %v963, 64
    %v966 = vpop.permute.xlu0 %965
    %v968 = vmul.f32 %v950, %v966
    %v969 = vld [vmem:[%s2] sm:$0xff]
    %v970 = vld [vmem:[%s2 + $0x8] sm:$0xff]
    %v971 = vld [vmem:[%s2 + $0x10] sm:$0xff]
    %v972 = vld [vmem:[%s2 + $0x18] sm:$0xff]
    %v973 = vld [vmem:[%s2 + $0x20] sm:$0x3]
    %v974 = vld [vmem:[%s2 + $0x22] sm:$0x1]
    %v975 = vld [vmem:[%s3] sm:$0x3]
    %977 = vrot.lane.b32.xlu0 %v968, 32
    %v978 = vpop.permute.xlu0 %977
    %vm980 = vcmask 64512
    %v982 = vsel %vm980, %v975, 0
    %984 = vmatprep.subr.mxu0 0.0
    %985 = vmatpush1.msra.mxu0 0.0
    %986 = vmatprep.subr.mxu0 0.0
    %987 = vmatpush1.msra.mxu0 0.0
    %988 = vmatprep.subr.mxu0 0.0
    %989 = vmatpush1.msra.mxu0 0.0
    %990 = vmatprep.subr.mxu0 0.0
    %991 = vmatpush1.msra.mxu0 0.0
    %992 = vmatprep.subr.mxu0 0.0
    %993 = vmatpush1.msra.mxu0 0.0
    %994 = vmatprep.subr.mxu0 0.0
    %995 = vmatpush1.msra.mxu0 0.0
    %996 = vmatprep.subr.mxu0 0.0
    %997 = vmatpush1.msra.mxu0 0.0
    %998 = vmatprep.subr.mxu0 0.0
    %999 = vmatpush1.msra.mxu0 0.0
    %1000 = vmatprep.subr.mxu0 0.0
    %1001 = vmatpush1.msra.mxu0 0.0
    %1002 = vmatprep.subr.mxu0 0.0
    %1003 = vmatpush1.msra.mxu0 0.0
    %1004 = vmatprep.subr.mxu0 0.0
    %1005 = vmatpush1.msra.mxu0 0.0
    %1006 = vmatprep.subr.mxu0 0.0
    %1007 = vmatpush1.msra.mxu0 0.0
    %1008 = vmatprep.subr.mxu0 0.0
    %1009 = vmatpush1.msra.mxu0 0.0
    %1010 = vmatprep.subr.mxu0 0.0
    %1011 = vmatpush1.msra.mxu0 0.0
    %1012 = vmatprep.subr.mxu0 0.0
    %1013 = vmatpush1.msra.mxu0 0.0
    %1014 = vmatprep.subr.mxu0 0.0
    %1015 = vmatpush1.msra.mxu0 %v978
    %1016 = vmatprep.subr.mxu0 0.0
    %1017 = vmatpush2.msra.mxu0 0.0
    %1018 = vmatprep.subr.mxu0 0.0
    %1019 = vmatpush2.msra.mxu0 0.0
    %1020 = vmatprep.subr.mxu0 0.0
    %1021 = vmatpush2.msra.mxu0 0.0
    %1022 = vmatprep.subr.mxu0 0.0
    %1023 = vmatpush2.msra.mxu0 0.0
    %1024 = vmatprep.subr.mxu0 0.0
    %1025 = vmatpush2.msra.mxu0 0.0
    %1026 = vmatprep.subr.mxu0 0.0
    %1027 = vmatpush2.msra.mxu0 0.0
    %1028 = vmatprep.subr.mxu0 0.0
    %1029 = vmatpush2.msra.mxu0 0.0
    %1030 = vmatprep.subr.mxu0 0.0
    %1031 = vmatpush2.msra.mxu0 0.0
    %1032 = vmatprep.subr.mxu0 0.0
    %1033 = vmatpush2.msra.mxu0 0.0
    %1034 = vmatprep.subr.mxu0 0.0
    %1035 = vmatpush2.msra.mxu0 0.0
    %1036 = vmatprep.subr.mxu0 0.0
    %1037 = vmatpush2.msra.mxu0 0.0
    %1038 = vmatprep.subr.mxu0 0.0
    %1039 = vmatpush2.msra.mxu0 0.0
    %1040 = vmatprep.subr.mxu0 0.0
    %1041 = vmatpush2.msra.mxu0 0.0
    %1042 = vmatprep.subr.mxu0 0.0
    %1043 = vmatpush2.msra.mxu0 0.0
    %1044 = vmatprep.subr.mxu0 0.0
    %1045 = vmatpush2.msra.mxu0 0.0
    %1046 = vmatprep.subr.mxu0 0.0
    %1047 = vmatpush2.msra.mxu0 0.0
    %1048 = vmatprep.mubr.f32.mxu0 0.0
    %1049 = vmatmul.mubr.f32.gmra.mxu0 %v982
    %v1050 = vpop.f32.mrf.mxu0
    %v1051 = vadd.f32 0.0, %v1050
    %v1052 = vpop.f32.mrf.mxu0
    %1053 = vdwg.mxu0
    %1054 = vrot.lane.b32.xlu0 %v975, 120
    %v1055 = vpop.permute.xlu0 %1054
    %vm1056 = vcmask 15360
    %v1057 = vsel %vm1056, %v1055, 0
    %vm1059 = vcmask 1041408
    %v1061 = vsel %vm1059, %v973, 0
    %1063 = vmatprep.subr.mxu0 0.0
    %1064 = vmatpush1.msra.mxu0 0.0
    %1065 = vmatprep.subr.mxu0 0.0
    %1066 = vmatpush1.msra.mxu0 0.0
    %1067 = vmatprep.subr.mxu0 0.0
    %1068 = vmatpush1.msra.mxu0 0.0
    %1069 = vmatprep.subr.mxu0 0.0
    %1070 = vmatpush1.msra.mxu0 0.0
    %1071 = vmatprep.subr.mxu0 0.0
    %1072 = vmatpush1.msra.mxu0 0.0
    %1073 = vmatprep.subr.mxu0 0.0
    %1074 = vmatpush1.msra.mxu0 0.0
    %1075 = vmatprep.subr.mxu0 0.0
    %1076 = vmatpush1.msra.mxu0 0.0
    %1077 = vmatprep.subr.mxu0 0.0
    %1078 = vmatpush1.msra.mxu0 0.0
    %1079 = vmatprep.subr.mxu0 0.0
    %1080 = vmatpush1.msra.mxu0 0.0
    %1081 = vmatprep.subr.mxu0 0.0
    %1082 = vmatpush1.msra.mxu0 0.0
    %1083 = vmatprep.subr.mxu0 0.0
    %1084 = vmatpush1.msra.mxu0 0.0
    %1085 = vmatprep.subr.mxu0 0.0
    %1086 = vmatpush1.msra.mxu0 0.0
    %1087 = vmatprep.subr.mxu0 0.0
    %1088 = vmatpush1.msra.mxu0 0.0
    %1089 = vmatprep.subr.mxu0 0.0
    %1090 = vmatpush1.msra.mxu0 0.0
    %1091 = vmatprep.subr.mxu0 0.0
    %1092 = vmatpush1.msra.mxu0 0.0
    %1093 = vmatprep.subr.mxu0 0.0
    %1094 = vmatpush1.msra.mxu0 %v1061
    %1095 = vmatprep.subr.mxu0 0.0
    %1096 = vmatpush2.msra.mxu0 0.0
    %1097 = vmatprep.subr.mxu0 0.0
    %1098 = vmatpush2.msra.mxu0 0.0
    %1099 = vmatprep.subr.mxu0 0.0
    %1100 = vmatpush2.msra.mxu0 0.0
    %1101 = vmatprep.subr.mxu0 0.0
    %1102 = vmatpush2.msra.mxu0 0.0
    %1103 = vmatprep.subr.mxu0 0.0
    %1104 = vmatpush2.msra.mxu0 0.0
    %1105 = vmatprep.subr.mxu0 0.0
    %1106 = vmatpush2.msra.mxu0 0.0
    %1107 = vmatprep.subr.mxu0 0.0
    %1108 = vmatpush2.msra.mxu0 0.0
    %1109 = vmatprep.subr.mxu0 0.0
    %1110 = vmatpush2.msra.mxu0 0.0
    %1111 = vmatprep.subr.mxu0 0.0
    %1112 = vmatpush2.msra.mxu0 0.0
    %1113 = vmatprep.subr.mxu0 0.0
    %1114 = vmatpush2.msra.mxu0 0.0
    %1115 = vmatprep.subr.mxu0 0.0
    %1116 = vmatpush2.msra.mxu0 0.0
    %1117 = vmatprep.subr.mxu0 0.0
    %1118 = vmatpush2.msra.mxu0 0.0
    %1119 = vmatprep.subr.mxu0 0.0
    %1120 = vmatpush2.msra.mxu0 0.0
    %1121 = vmatprep.subr.mxu0 0.0
    %1122 = vmatpush2.msra.mxu0 0.0
    %1123 = vmatprep.subr.mxu0 0.0
    %1124 = vmatpush2.msra.mxu0 0.0
    %1125 = vmatprep.subr.mxu0 0.0
    %1126 = vmatpush2.msra.mxu0 0.0
    %1127 = vmatprep.mubr.f32.mxu0 0.0
    %1128 = vmatmul.mubr.f32.gmra.mxu0 %v1057
    %v1129 = vpop.f32.mrf.mxu0
    %v1130 = vadd.f32 0.0, %v1129
    %v1131 = vpop.f32.mrf.mxu0
    %1132 = vdwg.mxu0
    %v1134 = vsel %vm170, %v1051, 0
    %1136 = vmatprep.subr.mxu0 0.0
    %1137 = vmatpush1.msra.mxu0 0.0
    %1138 = vmatprep.subr.mxu0 0.0
    %1139 = vmatpush1.msra.mxu0 0.0
    %1140 = vmatprep.subr.mxu0 0.0
    %1141 = vmatpush1.msra.mxu0 0.0
    %1142 = vmatprep.subr.mxu0 0.0
    %1143 = vmatpush1.msra.mxu0 0.0
    %1144 = vmatprep.subr.mxu0 0.0
    %1145 = vmatpush1.msra.mxu0 0.0
    %1146 = vmatprep.subr.mxu0 0.0
    %1147 = vmatpush1.msra.mxu0 0.0
    %1148 = vmatprep.subr.mxu0 0.0
    %1149 = vmatpush1.msra.mxu0 0.0
    %1150 = vmatprep.subr.mxu0 0.0
    %1151 = vmatpush1.msra.mxu0 0.0
    %1152 = vmatprep.subr.mxu0 0.0
    %1153 = vmatpush1.msra.mxu0 0.0
    %1154 = vmatprep.subr.mxu0 0.0
    %1155 = vmatpush1.msra.mxu0 0.0
    %1156 = vmatprep.subr.mxu0 0.0
    %1157 = vmatpush1.msra.mxu0 0.0
    %1158 = vmatprep.subr.mxu0 0.0
    %1159 = vmatpush1.msra.mxu0 0.0
    %1160 = vmatprep.subr.mxu0 0.0
    %1161 = vmatpush1.msra.mxu0 %v972
    %1162 = vmatprep.subr.mxu0 0.0
    %1163 = vmatpush1.msra.mxu0 %v971
    %1164 = vmatprep.subr.mxu0 0.0
    %1165 = vmatpush1.msra.mxu0 %v970
    %1166 = vmatprep.subr.mxu0 0.0
    %1167 = vmatpush1.msra.mxu0 %v969
    %1168 = vmatprep.subr.mxu0 0.0
    %1169 = vmatpush2.msra.mxu0 0.0
    %1170 = vmatprep.subr.mxu0 0.0
    %1171 = vmatpush2.msra.mxu0 0.0
    %1172 = vmatprep.subr.mxu0 0.0
    %1173 = vmatpush2.msra.mxu0 0.0
    %1174 = vmatprep.subr.mxu0 0.0
    %1175 = vmatpush2.msra.mxu0 0.0
    %1176 = vmatprep.subr.mxu0 0.0
    %1177 = vmatpush2.msra.mxu0 0.0
    %1178 = vmatprep.subr.mxu0 0.0
    %1179 = vmatpush2.msra.mxu0 0.0
    %1180 = vmatprep.subr.mxu0 0.0
    %1181 = vmatpush2.msra.mxu0 0.0
    %1182 = vmatprep.subr.mxu0 0.0
    %1183 = vmatpush2.msra.mxu0 0.0
    %1184 = vmatprep.subr.mxu0 0.0
    %1185 = vmatpush2.msra.mxu0 0.0
    %1186 = vmatprep.subr.mxu0 0.0
    %1187 = vmatpush2.msra.mxu0 0.0
    %1188 = vmatprep.subr.mxu0 0.0
    %1189 = vmatpush2.msra.mxu0 0.0
    %1190 = vmatprep.subr.mxu0 0.0
    %1191 = vmatpush2.msra.mxu0 0.0
    %1192 = vmatprep.subr.mxu0 0.0
    %1193 = vmatpush2.msra.mxu0 0.0
    %1194 = vmatprep.subr.mxu0 0.0
    %1195 = vmatpush2.msra.mxu0 0.0
    %1196 = vmatprep.subr.mxu0 0.0
    %1197 = vmatpush2.msra.mxu0 0.0
    %1198 = vmatprep.subr.mxu0 0.0
    %1199 = vmatpush2.msra.mxu0 0.0
    %1200 = vmatprep.mubr.f32.mxu0 0.0
    %1201 = vmatmul.mubr.f32.gmra.mxu0 %v1134
    %v1202 = vpop.f32.mrf.mxu0
    %v1203 = vadd.f32 %v1130, %v1202
    %v1204 = vpop.f32.mrf.mxu0
    %1205 = vdwg.mxu0
    %v1206 = vlaneseq
    %v1207 = vshrl.u32 %v1206, 7
    %v1208 = vsub.s32 0, %v1207
    %v1209 = vrot.slane %v974, %v1208
    %v1210 = vadd.f32 %v1203, %v1209
    %v1211 = vtanh.pop %v1210
    %vm1212 = vcmask 123904
    %1213 = vst.msk [vmem:[#allocation2] sm:$0x3] %vm1212, %v1211
    // Predicated region
    $region18: #{tpu_custom_call.1} parent=1 // pred_check
      _
    $region19: #{tpu_custom_call.1} parent=1 // pred_check_branch
      %1215 = sbr.rel (0) target = $region21
    $region20: #{tpu_custom_call.1} parent=1 // pred_region
      %s1217 = ssub.s32 32, 32
      %1218 = vsyncadd [#allocation3], %s1217
      %s1220 = sshll.u32 [#allocation2], 4
      %s1221 = int_to_ptr.vmem [resolvable:$true] %s1220
      %1223 = dma.vmem_to_hbm [thread:$0]  %s1221, 32, %s4, [#allocation3]
    $region21: #{tpu_custom_call.1} parent=1 // pred_fallthru
      _
    // Predicated region
    $region22: #{tpu_custom_call.1} parent=1 // pred_check
      _
    $region23: #{tpu_custom_call.1} parent=1 // pred_check_branch
      %1225 = sbr.rel (0) target = $region25
    $region24: #{tpu_custom_call.1} parent=1 // pred_region
      %1226 = dma.done [#allocation3], 32
    $region25: #{tpu_custom_call.1} parent=1 // pred_fallthru
      _
    %1227 = vsyncpa [#allocation3], 1

</llo_original>
